<compile_context>
chip_gen: v5e
topology: v5e:2x2
jax: 0.10.0
libtpu: 0.0.40
codegen_flags: <defaults>
</compile_context>

<pallas_src>
import functools

import jax
import jax.numpy as jnp
from jax.experimental import pallas as pl
from jax.experimental.pallas import tpu as pltpu

_LANE = 128
_FOLD_CHUNK_ROWS = 512   # rows folded per unrolled step inside a block
_ACC_ROWS = 32           # accumulator sublane rows (multiple of 8 -> free reshape)


def _fold_tile(x_ref, *, tile_rows, chunk_rows, acc_rows,
               row0=None, valid_rows=None):
    """Fold a (tile_rows, 128) native-dtype block into an (acc_rows, 128) f32 value.

    The block is consumed in `chunk_rows`-row static slices straight from the
    VMEM ref (free views), cast to f32 per chunk (no full-block f32 temporary)
    and folded with plain VPU adds.  When `row0` is given, each chunk is masked
    by global row index (ragged / out-of-range blocks)."""
    groups = chunk_rows // acc_rows
    total = None
    for c in range(tile_rows // chunk_rows):
        xc = x_ref[pl.ds(c * chunk_rows, chunk_rows), :]
        if row0 is not None:
            row = row0 + c * chunk_rows + jax.lax.broadcasted_iota(
                jnp.int32, (chunk_rows, _LANE), 0)
            xc = jnp.where(row < valid_rows, xc, jnp.zeros_like(xc))
        xf = xc.astype(jnp.float32)
        if groups > 1:
            part = jnp.sum(xf.reshape(groups, acc_rows, _LANE), axis=0)
        else:
            part = xf
        total = part if total is None else total + part
    return total


def _reduce_kernel(scale_ref, x_ref, o_ref, acc_ref, *,
                   tile_rows, chunk_rows, acc_rows, blocks_per_part,
                   valid_rows, needs_mask):
    """Grid = (num_parts, blocks_per_part); inner axis is the serial reduction."""
    part = pl.program_id(0)
    k = pl.program_id(1)
    gblk = part * blocks_per_part + k

    @pl.when(k == 0)
    def _():
        acc_ref[...] = jnp.zeros_like(acc_ref)

    fold = functools.partial(_fold_tile, x_ref, tile_rows=tile_rows,
                             chunk_rows=chunk_rows, acc_rows=acc_rows)

    if needs_mask:
        # Only blocks overhanging the logical row count pay for the mask.
        is_ragged = (gblk + 1) * tile_rows > valid_rows

        @pl.when(jnp.logical_not(is_ragged))
        def _():
            acc_ref[...] += fold()

        @pl.when(is_ragged)
        def _():
            acc_ref[...] += fold(row0=gblk * tile_rows, valid_rows=valid_rows)
    else:
        acc_ref[...] += fold()

    @pl.when(k == pl.num_programs(1) - 1)
    def _():
        # scale = weight ('sum') or weight / numel ('mean'), read from SMEM.
        o_ref[...] = scale_ref[0] * jnp.sum(acc_ref[...], keepdims=True)


def box_regularizer_forward(reg_unreduced, *, weight, reduction="sum",
                            target_block_bytes=4 * 1024 * 1024,
                            core_parallel=False):
    """weight * reduce(reg_unreduced), reduction in {'sum', 'mean'}.

    Returns a float32 scalar (accumulation is always done in float32).
    Set core_parallel=True on v7x (2 TensorCores/chip) to shard the two
    partial-sum streams across cores via pltpu.CORE_PARALLEL.
    """
    if reduction not in ("sum", "mean"):
        raise ValueError(reduction)

    n = reg_unreduced.size
    itemsize = reg_unreduced.dtype.itemsize
    # Combined scale applied once per part in the epilogue; passed through SMEM
    # so changing `weight` never bakes a new constant into the kernel.
    scale_val = weight if reduction == "sum" else weight / n
    scale = jnp.full((1,), scale_val, dtype=jnp.float32)

    # Lane-major 2-D view of the flattened tensor.  Row raggedness is handled
    # in-kernel (no padding to block/vreg multiples); only a lane-misaligned
    # size (n % 128 != 0) still needs a zero pad (sum-safe; 'mean' uses true n).
    x = reg_unreduced.reshape(-1)
    pad = (-n) % _LANE
    if pad:
        x = jnp.pad(x, (0, pad))
    m_rows = x.size // _LANE
    x2 = x.reshape(m_rows, _LANE)

    # --- block sizing (dtype-aware byte budget, ~4 MiB -> 8 MiB double-buffered)
    max_tile_rows = max(_FOLD_CHUNK_ROWS,
                        (target_block_bytes // (_LANE * itemsize))
                        // _FOLD_CHUNK_ROWS * _FOLD_CHUNK_ROWS)
    if m_rows >= _FOLD_CHUNK_ROWS:
        tile_rows = min(max_tile_rows,
                        (m_rows // _FOLD_CHUNK_ROWS) * _FOLD_CHUNK_ROWS)
        chunk_rows = _FOLD_CHUNK_ROWS
        acc_rows = _ACC_ROWS
    elif m_rows >= _ACC_ROWS:
        tile_rows = (m_rows // _ACC_ROWS) * _ACC_ROWS
        chunk_rows = tile_rows
        acc_rows = _ACC_ROWS
    else:
        tile_rows = m_rows          # block == full array dim -> always legal
        chunk_rows = tile_rows
        acc_rows = tile_rows        # no reshape needed in the fold

    inner_blocks = pl.cdiv(m_rows, tile_rows)
    # Two independent partial sums whenever there is more than one block; on
    # v7x with core_parallel=True each TensorCore streams one half, on v5e/v6e
    # the second part only costs one extra tiny init/epilogue.
    num_parts = 2 if inner_blocks >= 2 else 1
    blocks_per_part = pl.cdiv(inner_blocks, num_parts)
    last_block = inner_blocks - 1
    needs_mask = num_parts * blocks_per_part * tile_rows > m_rows

    def x_index_map(c, k):
        g = c * blocks_per_part + k
        if num_parts * blocks_per_part > inner_blocks:
            # Uneven split: clamp fully out-of-range steps onto the last valid
            # block (in-bounds DMA); the in-kernel row mask zeroes them out.
            g = jnp.minimum(g, last_block)
        return (g, 0)

    kernel = functools.partial(
        _reduce_kernel,
        tile_rows=tile_rows, chunk_rows=chunk_rows, acc_rows=acc_rows,
        blocks_per_part=blocks_per_part, valid_rows=m_rows,
        needs_mask=needs_mask)

    outer_sem = pltpu.CORE_PARALLEL if core_parallel else pltpu.PARALLEL
    cost = pl.CostEstimate(flops=int(n), transcendentals=0,
                           bytes_accessed=int(n) * int(itemsize) + 4 * num_parts + 4)

    partials = pl.pallas_call(
        kernel,
        out_shape=jax.ShapeDtypeStruct((num_parts, 1), jnp.float32),
        grid_spec=pltpu.PrefetchScalarGridSpec(
            num_scalar_prefetch=0,
            grid=(num_parts, blocks_per_part),
            in_specs=[
                pl.BlockSpec(memory_space=pltpu.MemorySpace.SMEM),   # scale
                pl.BlockSpec((tile_rows, _LANE), x_index_map),
            ],
            out_specs=pl.BlockSpec((1, 1), lambda c, k: (c, 0)),
            scratch_shapes=[pltpu.VMEM((acc_rows, _LANE), jnp.float32)],
        ),
        compiler_params=pltpu.CompilerParams(
            dimension_semantics=(outer_sem, pltpu.ARBITRARY),
            # Explicit limit: covers double-buffered ~4 MiB blocks everywhere
            # and raises v5e's 16 MiB default scoped VMEM.
            vmem_limit_bytes=32 * 1024 * 1024),
        cost_estimate=cost,
    )(scale, x2)

    # Combine the (at most 2) per-part partial sums; scale is already applied.
    return jnp.sum(partials)


if __name__ == "__main__":
    key = jax.random.PRNGKey(0)
    k1, k2, k3, k4 = jax.random.split(key, 4)
    weight = 0.1

    # Unreduced per-box regularization values, e.g. derived from a BoxTensor
    # with batch=2, 4 boxes, z/Z pair over box_dim=16 -> shape (2, 4, 16, 16).
    reg = jax.random.normal(k1, (2, 4, 16, 16), dtype=jnp.float32)
    out_sum = jax.block_until_ready(
        box_regularizer_forward(reg, weight=weight, reduction="sum"))
    out_mean = jax.block_until_ready(
        box_regularizer_forward(reg, weight=weight, reduction="mean"))
    ref_sum = weight * jnp.sum(reg)
    ref_mean = weight * jnp.mean(reg)
    assert jnp.allclose(out_sum, ref_sum, rtol=1e-5, atol=1e-5), (out_sum, ref_sum)
    assert jnp.allclose(out_mean, ref_mean, rtol=1e-5, atol=1e-6), (out_mean, ref_mean)

    # bf16 + lane-misaligned size: exercises the lane-pad fallback, two parts
    # and the gated ragged-row mask on the last block.
    reg2 = jax.random.normal(k2, (5, 1400), dtype=jnp.bfloat16)
    out2 = jax.block_until_ready(
        box_regularizer_forward(reg2, weight=weight, reduction="mean"))
    ref2 = weight * jnp.mean(reg2.astype(jnp.float32))
    assert jnp.allclose(out2, ref2, rtol=1e-3, atol=1e-3), (out2, ref2)

    # 128-aligned but block-ragged f32 stream: no padding at all, chunked fast
    # path + masked last block, two parts.
    reg3 = jax.random.normal(k3, (300, 256), dtype=jnp.float32)
    out3 = jax.block_until_ready(
        box_regularizer_forward(reg3, weight=weight, reduction="sum"))
    ref3 = weight * jnp.sum(reg3)
    assert jnp.allclose(out3, ref3, rtol=1e-4, atol=1e-3), (out3, ref3)

    # Odd block count with a small block budget: exercises the uneven 2-part
    # split and the clamped index_map (fully out-of-range step masked to zero).
    reg4 = jax.random.normal(k4, (1300, 128), dtype=jnp.float32)
    out4 = jax.block_until_ready(
        box_regularizer_forward(reg4, weight=weight, reduction="mean",
                                target_block_bytes=512 * 128 * 4))
    ref4 = weight * jnp.mean(reg4)
    assert jnp.allclose(out4, ref4, rtol=1e-3, atol=1e-6), (out4, ref4)

    print("KERNEL_OK")
</pallas_src>

<mosaic_0001>
module attributes {stable_mosaic.version = 11 : i64} {
  func.func @_reduce_kernel(%arg0: i32, %arg1: i32, %arg2: memref<1xf32, #tpu.memory_space<smem>>, %arg3: memref<16x128xf32, #tpu.memory_space<vmem>>, %arg4: memref<1x1xf32, #tpu.memory_space<vmem>>, %arg5: memref<16x128xf32, #tpu.memory_space<vmem>>) attributes {dimension_semantics = [#tpu.dimension_semantics<parallel>, #tpu.dimension_semantics<arbitrary>], iteration_bounds = array<i64: 1, 1>, scalar_prefetch = 0 : i64, scratch_operands = 1 : i64, tpu.core_type = #tpu.core_type<tc>, window_params = [{transform_indices = @transform_0, window_bounds = array<i64: 1>}, {transform_indices = @transform_1, window_bounds = array<i64: 16, 128>}, {transform_indices = @transform_2, window_bounds = array<i64: 1, 1>}]} {
    %c0_i32 = arith.constant 0 : i32
    %0 = arith.cmpi eq, %arg1, %c0_i32 : i32
    %1 = arith.extui %0 : i1 to i32
    %c0_i32_0 = arith.constant 0 : i32
    %2 = arith.cmpi ne, %1, %c0_i32_0 : i32
    scf.if %2 {
      %cst = arith.constant 0.000000e+00 : f32
      %10 = vector.broadcast %cst : f32 to vector<16x128xf32>
      %c0_8 = arith.constant 0 : index
      %c0_9 = arith.constant 0 : index
      %11 = vector.load %arg5[%c0_8, %c0_9] : memref<16x128xf32, #tpu.memory_space<vmem>>, vector<16x128xf32>
      tpu.vector_store %arg5[%c0_8, %c0_9], %10 {strides = array<i32>} : memref<16x128xf32, #tpu.memory_space<vmem>>, vector<16x128xf32>,
    } else {
    }
    %c0 = arith.constant 0 : index
    %c0_1 = arith.constant 0 : index
    %3 = vector.load %arg5[%c0, %c0_1] : memref<16x128xf32, #tpu.memory_space<vmem>>, vector<16x128xf32>
    %c0_2 = arith.constant 0 : index
    %c0_3 = arith.constant 0 : index
    %4 = vector.load %arg3[%c0_2, %c0_3] : memref<16x128xf32, #tpu.memory_space<vmem>>, vector<16x128xf32>
    %5 = arith.addf %3, %4 : vector<16x128xf32>
    %c0_4 = arith.constant 0 : index
    %c0_5 = arith.constant 0 : index
    %6 = vector.load %arg5[%c0_4, %c0_5] : memref<16x128xf32, #tpu.memory_space<vmem>>, vector<16x128xf32>
    tpu.vector_store %arg5[%c0_4, %c0_5], %5 {strides = array<i32>} : memref<16x128xf32, #tpu.memory_space<vmem>>, vector<16x128xf32>,
    %c0_i32_6 = arith.constant 0 : i32
    %7 = arith.cmpi eq, %arg1, %c0_i32_6 : i32
    %8 = arith.extui %7 : i1 to i32
    %c0_i32_7 = arith.constant 0 : i32
    %9 = arith.cmpi ne, %8, %c0_i32_7 : i32
    scf.if %9 {
      %c0_8 = arith.constant 0 : index
      %10 = memref.load %arg2[%c0_8] : memref<1xf32, #tpu.memory_space<smem>>
      %c0_9 = arith.constant 0 : index
      %c0_10 = arith.constant 0 : index
      %11 = vector.load %arg5[%c0_9, %c0_10] : memref<16x128xf32, #tpu.memory_space<vmem>>, vector<16x128xf32>
      %12 = vector.shape_cast %11 : vector<16x128xf32> to vector<1x16x128xf32>
      %cst = arith.constant dense<0.000000e+00> : vector<1xf32>
      %13 = vector.multi_reduction <add>, %12, %cst [1, 2] : vector<1x16x128xf32> to vector<1xf32>
      %14 = vector.shape_cast %13 : vector<1xf32> to vector<1x1x1xf32>
      %15 = vector.extract %14[0, 0, 0] : f32 from vector<1x1x1xf32>
      %16 = vector.broadcast %15 : f32 to vector<1x1xf32>
      %17 = vector.broadcast %10 : f32 to vector<1x1xf32>
      %18 = arith.mulf %17, %16 : vector<1x1xf32>
      %c0_11 = arith.constant 0 : index
      %c0_12 = arith.constant 0 : index
      %19 = vector.load %arg4[%c0_11, %c0_12] : memref<1x1xf32, #tpu.memory_space<vmem>>, vector<1x1xf32>
      tpu.vector_store %arg4[%c0_11, %c0_12], %18 {strides = array<i32>} : memref<1x1xf32, #tpu.memory_space<vmem>>, vector<1x1xf32>,
    } else {
    }
    return
  }
  func.func @transform_0(%arg0: i32, %arg1: i32) -> i32 {
    %c0_i32 = arith.constant 0 : i32
    %c0_i32_0 = arith.constant 0 : i32
    return %c0_i32 : i32
  }
  func.func @transform_1(%arg0: i32, %arg1: i32) -> (i32, i32) {
    %c1_i32 = arith.constant 1 : i32
    %0 = arith.muli %arg0, %c1_i32 : i32
    %1 = arith.addi %0, %arg1 : i32
    %c0_i32 = arith.constant 0 : i32
    %c0_i32_0 = arith.constant 0 : i32
    return %1, %c0_i32 : i32, i32
  }
  func.func @transform_2(%arg0: i32, %arg1: i32) -> (i32, i32) {
    %c0_i32 = arith.constant 0 : i32
    %c0_i32_0 = arith.constant 0 : i32
    return %arg0, %c0_i32 : i32, i32
  }
}

</mosaic_0001>

<llo_original>
// kernel: tpu_custom_call.1
$region0: #{tpu_custom_call.1}
  #allocation0 [shape = 'u32[]', space=smem, size = 0x4, offset = 0x4, fixed_abs, tag = 'smem constant byte address 0x4 - core index']
  #allocation1 [shape = 'u32[72,128]{1,0:T(1,128)}', space=vmem, size = 0x9000, scoped, tag = 'internal scratch']
  #allocation2 [shape = 'f32[16,128]{1,0:T(8,128)}', space=vmem, size = 0x2000, scoped, tag = 'scratch operand']
  #allocation3 [shape = 'f32[1]{0:T(128)S(6)}', space=smem, size = 0x200, scoped, tag = 'scoped memory for tpu_custom_call.1']
  %s0 = inlined_call_operand.<no memory space> [shape: f32[1], index: 0, kind: input, shape index: {}]
  %s1 = inlined_call_operand.hbm [shape: f32[16,128], index: 1, kind: input, shape index: {}]
  %s2 = inlined_call_operand.hbm [shape: f32[1,1], index: 2, kind: output, shape index: {}]
  %s3 = sld [smem:[#allocation0]]
  $region30: #{tpu_custom_call.1} parent=0
    _
  %s5 = ssub.s32 1, %s3
  %s6 = scalar_select 0, %s5, %s3
  %7 = sst [smem:[#allocation3]] %s0
  $region1: #{tpu_custom_call.1} parent=0
    #allocation4 [shape = 'u8[8192]{0}', space=vmem, size = 0x2000, scoped, tag = 'input window, operand 1, single buffered']
    #allocation5 [shape = 's32[1]{0}', space=sflag, size = 0x4, scoped, tag = 'scoped memory for tpu_custom_call.1']
    #allocation6 [shape = 's32[1]{0}', space=sflag, size = 0x4, scoped, tag = 'scoped memory for tpu_custom_call.1']
    #allocation7 [shape = 'u8[512]{0}', space=vmem, size = 0x400, scoped, tag = 'output window, operand 0, single buffered']
    %8 = vsyncpa [#allocation5], 0
    %9 = vsyncpa [#allocation6], 0
    // Predicated region
    $region2: #{tpu_custom_call.1} parent=1 // pred_check
      _
    $region3: #{tpu_custom_call.1} parent=1 // pred_check_branch
      %11 = sbr.rel (0) target = $region5
    $region4: #{tpu_custom_call.1} parent=1 // pred_region
      _
    $region5: #{tpu_custom_call.1} parent=1 // pred_fallthru
      _
    // Predicated region
    $region6: #{tpu_custom_call.1} parent=1 // pred_check
      _
    $region7: #{tpu_custom_call.1} parent=1 // pred_check_branch
      %13 = sbr.rel (0) target = $region9
    $region8: #{tpu_custom_call.1} parent=1 // pred_region
      %s14 = sadd.s32 0, 0
      %s15 = smul.u32 2, %s14
      %17 = vsyncadd [#allocation5], 0
      %s18 = smul.addr %s15, 8
      %s19 = scalar_lea.hbm %s1, %s18
      %s20 = sshll.u32 %s19, 4
      %s21 = int_to_ptr.hbm [resolvable:$true] %s20
      %s22 = sshll.u32 [#allocation4], 4
      %s23 = int_to_ptr.vmem [resolvable:$true] %s22
      %28 = dma.hbm_to_vmem [thread:$0]  %s21, 256, %s23, [#allocation5], 128, 128, 8
    $region9: #{tpu_custom_call.1} parent=1 // pred_fallthru
      _
    // Predicated region
    $region10: #{tpu_custom_call.1} parent=1 // pred_check
      _
    $region11: #{tpu_custom_call.1} parent=1 // pred_check_branch
      %30 = sbr.rel (0) target = $region13
    $region12: #{tpu_custom_call.1} parent=1 // pred_region
      %32 = dma.done [#allocation5], 256
    $region13: #{tpu_custom_call.1} parent=1 // pred_fallthru
      _
    %s33 = sadd.s32 0, 0
    %s34 = smul.u32 2, %s33
    %p35 = scmp.eq.s32.totalorder 0, 0
    // Predicated region
    $region14: #{tpu_custom_call.1} parent=1 // pred_check
      %p36 = pneg %p35
    $region15: #{tpu_custom_call.1} parent=1 // pred_check_branch
      %38 = sbr.rel (%p36) target = $region17
    $region16: #{tpu_custom_call.1} parent=1 // pred_region
      %39 = vst [vmem:[#allocation2] sm:$0xff] 0.0
      %40 = vst [vmem:[#allocation2 + $0x8] sm:$0xff] 0.0
    $region17: #{tpu_custom_call.1} parent=1 // pred_fallthru
      _
    %v41 = vld [vmem:[#allocation2] sm:$0xff]
    %v42 = vld [vmem:[#allocation2 + $0x8] sm:$0xff]
    %v43 = vld [vmem:[#allocation4] sm:$0xff]
    %v44 = vld [vmem:[#allocation4 + $0x8] sm:$0xff]
    %v45 = vadd.f32 %v41, %v43
    %v46 = vadd.f32 %v42, %v44
    %47 = vst [vmem:[#allocation2] sm:$0xff] %v45
    %48 = vst [vmem:[#allocation2 + $0x8] sm:$0xff] %v46
    // Predicated region
    $region18: #{tpu_custom_call.1} parent=1 // pred_check
      %p49 = pneg %p35
    $region19: #{tpu_custom_call.1} parent=1 // pred_check_branch
      %51 = sbr.rel (%p49) target = $region21
    $region20: #{tpu_custom_call.1} parent=1 // pred_region
      %s52 = sld [smem:[#allocation3]]
      %v53 = vld [vmem:[#allocation2] sm:$0xff]
      %v54 = vld [vmem:[#allocation2 + $0x8] sm:$0xff]
      %v55 = vadd.f32 %v53, %v54
      %56 = vadd.xlane.f32.xlu0 %v55
      %v57 = vpop.xlane.xlu0 %56
      %v58 = vrot.slane %v57, 4
      %v59 = vadd.f32 %v57, %v58
      %v60 = vrot.slane %v59, 2
      %v61 = vadd.f32 %v59, %v60
      %v62 = vrot.slane %v61, 1
      %v63 = vadd.f32 %v61, %v62
      %s64 = vtos %v63
      %v65 = vstv %s64
      %v66 = vstv %s52
      %v67 = vmul.f32 %v66, %v65
      %vm68 = vcmask 0
      %69 = vst.msk [vmem:[#allocation7] sm:$0x1] %vm68, %v67
    $region21: #{tpu_custom_call.1} parent=1 // pred_fallthru
      _
    // Predicated region
    $region22: #{tpu_custom_call.1} parent=1 // pred_check
      _
    $region23: #{tpu_custom_call.1} parent=1 // pred_check_branch
      %71 = sbr.rel (0) target = $region25
    $region24: #{tpu_custom_call.1} parent=1 // pred_region
      %73 = vsyncadd [#allocation6], 0
      %s75 = sshll.u32 [#allocation7], 4
      %s76 = int_to_ptr.vmem [resolvable:$true] %s75
      %s77 = sshll.u32 %s2, 4
      %s78 = int_to_ptr.hbm [resolvable:$true] %s77
      %80 = dma.vmem_to_hbm [thread:$0]  %s76, 16, %s78, [#allocation6]
    $region25: #{tpu_custom_call.1} parent=1 // pred_fallthru
      _
    // Predicated region
    $region26: #{tpu_custom_call.1} parent=1 // pred_check
      _
    $region27: #{tpu_custom_call.1} parent=1 // pred_check_branch
      %82 = sbr.rel (0) target = $region29
    $region28: #{tpu_custom_call.1} parent=1 // pred_region
      %84 = dma.done [#allocation6], 16
    $region29: #{tpu_custom_call.1} parent=1 // pred_fallthru
      _
    %85 = vsyncpa [#allocation5], 1
    %86 = vsyncpa [#allocation6], 1

</llo_original>
